<compile_context>
chip_gen: v5e
topology: v5e:2x2
jax: 0.10.0
libtpu: 0.0.40
codegen_flags: <defaults>
</compile_context>

<pallas_src>
import jax
import jax.numpy as jnp
from jax.experimental import pallas as pl
from jax.experimental.pallas import tpu as pltpu


def _round_up(v, m):
    return -(-v // m) * m


def _pick_batch_blocks(batch, per_batch_vmem_bytes, target_block_bytes=2 << 20):
    """Largest divisor of `batch` whose per-step x block still holds ~target bytes.

    Per-step overhead is only ~0.35 us and measured roofline fraction peaks at
    ~0.5-4 MiB blocks, so we aim for ~2 MiB blocks and otherwise keep the whole
    (tiny) batch in a single step.
    """
    bt_target = max(1, target_block_bytes // max(per_batch_vmem_bytes, 1))
    if bt_target >= batch:
        return 1
    best = 1
    for d in range(1, batch + 1):
        if batch % d == 0 and batch // d >= bt_target:
            best = d
    return best


def gat_forward(x, weight, ln_gamma, ln_beta, *, batch_blocks=None,
                use_bf16_matmul=False):
    """MTAD-GAT graph-attention forward.

    x: (B, N, F); weight: (2F,); ln_gamma / ln_beta: (N, N).  Returns (B, N, F).

    batch_blocks: number of grid steps the batch is split into.  None (default)
      auto-picks the largest divisor of B whose x block is still >= ~2 MiB so
      the BlockSpec pipeline has real DMA/compute overlap.  On v7x pass an even
      value >= 4 so both TensorCores get several steps each.
    use_bf16_matmul: cast the MXU operands (projection and att @ x) to bf16
      with f32 accumulation — worthwhile on v6e/v7x at MXU-native sizes; do not
      use on v5e (no bf16 VPU) and expect to relax the 1e-5 tolerance.
    """
    B, N, Feat = x.shape
    assert N % 8 == 0, "num_nodes must be a multiple of 8 (f32 sublane tile)"
    # TODO(synk): pad N to a multiple of 8 (and mask LayerNorm/softmax/matmul)
    # to support arbitrary node counts.

    lanes_f = _round_up(Feat, 128)                     # lane-padded feature width
    per_batch_vmem = N * lanes_f * 4                   # VMEM bytes of one batch of x
    if batch_blocks is None:
        batch_blocks = _pick_batch_blocks(B, per_batch_vmem)
    assert B % batch_blocks == 0
    BT = B // batch_blocks                             # batch elements per grid step

    # Lane-dense output path: write (BT, N*F) rows (last dim a multiple of 128)
    # instead of (BT*N, F) rows with only F of 128 lanes live.
    lane_dense_out = (N * Feat) % 128 == 0 and N <= 128

    # Pre-transpose the weight in the wrapper: col 0 = w1 (applied to x[b, j]),
    # col 1 = w2 (applied to x[b, i]).  No in-kernel transpose of w.
    wt = jnp.reshape(weight, (2, Feat)).T              # (F, 2)
    # Leading grid axis so the (8,128) rule holds for any BT (the block's last
    # two dims always equal the array's last two dims).
    x3d = x.reshape(batch_blocks, BT * N, Feat)

    mm_dtype = jnp.bfloat16 if use_bf16_matmul else jnp.float32

    def kernel(w_ref, gamma_ref, bias_ref, x_ref, o_ref):
        # w_ref: (F, 2); gamma_ref/bias_ref: (N, N); x_ref: (BT*N, F)
        # o_ref: (BT, N*F) if lane_dense_out else (BT*N, F)
        x2 = x_ref[...]                                               # (BT*N, F)
        # Tile-aligned sublane split (N % 8 == 0): no lane relayout.
        x3 = x2.reshape(BT, N, Feat)                                  # (BT, N, F)

        # Fused projection: ONE MXU pass gives alpha_j = x.w1 and beta_i = x.w2
        # for every row of the block.
        ab = jnp.dot(x2.astype(mm_dtype), w_ref[...].astype(mm_dtype),
                     preferred_element_type=jnp.float32)              # (BT*N, 2)
        ab3 = ab.reshape(BT, N, 2)
        alpha = ab3[:, :, 0:1]                                        # varies with j
        beta = ab3[:, :, 1:2]                                         # varies with i
        ones = jnp.ones((BT, N, 1), jnp.float32)

        # att[b, i, j] = beta[b, i] + alpha[b, j] as a batched rank-2 matmul
        # ([beta | 1] @ [1 | alpha]^T, contraction over the size-2 axis) so no
        # per-batch (N,1)->(1,N) cross-lane transpose is needed.
        att = jnp.einsum("bik,bjk->bij",
                         jnp.concatenate([beta, ones], axis=-1),
                         jnp.concatenate([ones, alpha], axis=-1),
                         preferred_element_type=jnp.float32)          # (BT, N, N)

        # LayerNorm over each (N, N) slab, eps = 1e-14, one-pass statistics
        # (values are O(0.1) post-projection, so E[x^2] - mean^2 is safe).
        inv_nn = 1.0 / float(N * N)
        s1 = jnp.sum(jnp.sum(att, axis=2, keepdims=True), axis=1, keepdims=True)
        s2 = jnp.sum(jnp.sum(att * att, axis=2, keepdims=True), axis=1,
                     keepdims=True)
        mean = s1 * inv_nn
        var = s2 * inv_nn - mean * mean
        scale = jax.lax.rsqrt(var + 1e-14)                            # (BT, 1, 1)
        att = (att - mean) * scale * gamma_ref[...][None] + bias_ref[...][None]

        # LeakyReLU(negative_slope=0.2) — single VPU max.
        att = jnp.maximum(att, 0.2 * att)

        # Softmax over dim=-2 (the i axis == axis 1).
        att = att - jnp.max(att, axis=1, keepdims=True)
        e = jnp.exp(att)
        denom = jnp.sum(e, axis=1, keepdims=True)
        rcp = pl.reciprocal(denom, approx=True)                       # EUP vrcp
        rcp = rcp * (2.0 - denom * rcp)                               # Newton -> ~f32
        att = e * rcp

        # out[b, i, f] = sum_j att[b, i, j] * x[b, j, f]; then sigmoid.
        out3 = jnp.einsum("bij,bjf->bif",
                          att.astype(mm_dtype), x3.astype(mm_dtype),
                          preferred_element_type=jnp.float32)         # (BT, N, F)
        out3 = jax.nn.sigmoid(out3)

        if lane_dense_out:
            # Pack the (N, F) view into lane-dense (BT, N*F) rows so the block's
            # HBM write-back is fully dense (and VMEM isn't lane-padded 8x).
            for i in range(N):
                o_ref[:, i * Feat:(i + 1) * Feat] = out3[:, i, :].astype(o_ref.dtype)
        else:
            o_ref[...] = out3.reshape(BT * N, Feat).astype(o_ref.dtype)

    if lane_dense_out:
        out_struct = jax.ShapeDtypeStruct((batch_blocks, BT, N * Feat), x.dtype)
        out_spec = pl.BlockSpec((pl.Squeezed(), BT, N * Feat),
                                lambda g: (g, 0, 0))
        o_blk_vmem = BT * N * Feat * 4
    else:
        out_struct = jax.ShapeDtypeStruct((batch_blocks, BT * N, Feat), x.dtype)
        out_spec = pl.BlockSpec((pl.Squeezed(), BT * N, Feat),
                                lambda g: (g, 0, 0))
        o_blk_vmem = BT * per_batch_vmem

    # VMEM budget: double-buffered x/out blocks + grid-invariant params +
    # in-kernel temporaries (a handful of (BT, N, N) and (BT, N, F) slabs),
    # clamped to v7x's 64 MiB physical VMEM.  Also overrides v5e's 16 MiB
    # default scoped limit.
    x_blk_vmem = BT * per_batch_vmem
    param_vmem = 2 * N * _round_up(N, 128) * 4 + Feat * 128 * 4
    tmp_vmem = 10 * BT * N * _round_up(N, 128) * 4 + 6 * x_blk_vmem
    vmem_est = 2 * (x_blk_vmem + o_blk_vmem) + 2 * param_vmem + tmp_vmem + (2 << 20)
    vmem_limit = int(min(max(vmem_est, 16 << 20), 64 << 20))

    out = pl.pallas_call(
        kernel,
        out_shape=out_struct,
        grid_spec=pltpu.PrefetchScalarGridSpec(
            num_scalar_prefetch=0,
            grid=(batch_blocks,),
            in_specs=[
                pl.BlockSpec((Feat, 2), lambda g: (0, 0)),        # w (grid-invariant)
                pl.BlockSpec((N, N), lambda g: (0, 0)),           # LayerNorm gamma
                pl.BlockSpec((N, N), lambda g: (0, 0)),           # LayerNorm beta
                pl.BlockSpec((pl.Squeezed(), BT * N, Feat),
                             lambda g: (g, 0, 0)),                # x batch block
            ],
            out_specs=out_spec,
        ),
        compiler_params=pltpu.CompilerParams(
            dimension_semantics=("parallel",),                    # megacore on v7x
            vmem_limit_bytes=vmem_limit,
        ),
    )(wt, ln_gamma, ln_beta, x3d)
    return out.reshape(B, N, Feat)


def gat_reference(x, weight, ln_gamma, ln_beta):
    """Pure-JAX reference mirroring the PyTorch forward (sanity check)."""
    B, N, Feat = x.shape
    xi = jnp.broadcast_to(x[:, None, :, :], (B, N, N, Feat))   # [b,i,j,:] = x[b,j,:]
    xj = jnp.broadcast_to(x[:, :, None, :], (B, N, N, Feat))   # [b,i,j,:] = x[b,i,:]
    att = jnp.concatenate([xi, xj], axis=-1) @ weight           # (B, N, N)
    mean = jnp.mean(att, axis=(-2, -1), keepdims=True)
    var = jnp.mean((att - mean) ** 2, axis=(-2, -1), keepdims=True)
    att = (att - mean) / jnp.sqrt(var + 1e-14) * ln_gamma + ln_beta
    att = jnp.where(att > 0, att, 0.2 * att)
    att = jax.nn.softmax(att, axis=-2)
    return jax.nn.sigmoid(jnp.einsum("bij,bjf->bif", att, x))


if __name__ == "__main__":
    B, N, Feat = 2, 8, 16       # batch, num_nodes, node_size
    init_range = 0.02

    key = jax.random.PRNGKey(0)
    kx, kw = jax.random.split(key)

    x = jax.random.normal(kx, (B, N, Feat), dtype=jnp.float32)
    # Deterministic parameter init matching the module's __init__:
    weight = jax.random.normal(kw, (2 * Feat,), dtype=jnp.float32) * init_range
    ln_gamma = jnp.ones((N, N), dtype=jnp.float32)   # LayerNorm weight (init ones)
    ln_beta = jnp.zeros((N, N), dtype=jnp.float32)   # LayerNorm bias (init zeros)

    out = gat_forward(x, weight, ln_gamma, ln_beta)
    out = jax.block_until_ready(out)

    ref = gat_reference(x, weight, ln_gamma, ln_beta)
    assert out.shape == (B, N, Feat)
    assert jnp.allclose(out, ref, atol=1e-5, rtol=1e-5)

    print("KERNEL_OK")
</pallas_src>

<mosaic_0001>
module attributes {stable_mosaic.version = 11 : i64} {
  func.func @kernel(%arg0: i32, %arg1: memref<16x2xf32, #tpu.memory_space<vmem>>, %arg2: memref<8x8xf32, #tpu.memory_space<vmem>>, %arg3: memref<8x8xf32, #tpu.memory_space<vmem>>, %arg4: memref<1x16x16xf32, #tpu.memory_space<vmem>>, %arg5: memref<1x2x128xf32, #tpu.memory_space<vmem>>) attributes {dimension_semantics = [#tpu.dimension_semantics<parallel>], iteration_bounds = array<i64: 1>, scalar_prefetch = 0 : i64, scratch_operands = 0 : i64, tpu.core_type = #tpu.core_type<tc>, window_params = [{pipeline_mode = #tpu.pipeline_mode<synchronous>, transform_indices = @transform_0, window_bounds = array<i64: 16, 2>}, {pipeline_mode = #tpu.pipeline_mode<synchronous>, transform_indices = @transform_1, window_bounds = array<i64: 8, 8>}, {pipeline_mode = #tpu.pipeline_mode<synchronous>, transform_indices = @transform_2, window_bounds = array<i64: 8, 8>}, {transform_indices = @transform_3, window_bounds = array<i64: 1, 16, 16>}, {transform_indices = @transform_4, window_bounds = array<i64: 1, 2, 128>}]} {
    %c0 = arith.constant 0 : index
    %c0_0 = arith.constant 0 : index
    %c0_1 = arith.constant 0 : index
    %0 = vector.load %arg4[%c0, %c0_0, %c0_1] : memref<1x16x16xf32, #tpu.memory_space<vmem>>, vector<1x16x16xf32>
    %1 = vector.shape_cast %0 : vector<1x16x16xf32> to vector<16x16xf32>
    %2 = vector.shape_cast %1 : vector<16x16xf32> to vector<2x8x16xf32>
    %c0_2 = arith.constant 0 : index
    %c0_3 = arith.constant 0 : index
    %3 = vector.load %arg1[%c0_2, %c0_3] : memref<16x2xf32, #tpu.memory_space<vmem>>, vector<16x2xf32>
    %cst = arith.constant dense<0.000000e+00> : vector<16x2xf32>
    %4 = tpu.matmul %1, %3, %cst {dimension_numbers = #tpu.dot_dimension_numbers<[1], [0], [0], [1], [0, 0, 1, 1], [], []>} : vector<16x16xf32>, vector<16x2xf32>, vector<16x2xf32> -> vector<16x2xf32>
    %5 = vector.shape_cast %4 : vector<16x2xf32> to vector<2x8x2xf32>
    %6 = vector.extract_strided_slice %5 {offsets = [0, 0, 0], sizes = [2, 8, 1], strides = [1, 1, 1]} : vector<2x8x2xf32> to vector<2x8x1xf32>
    %7 = vector.extract_strided_slice %5 {offsets = [0, 0, 1], sizes = [2, 8, 1], strides = [1, 1, 1]} : vector<2x8x2xf32> to vector<2x8x1xf32>
    %cst_4 = arith.constant 1.000000e+00 : f32
    %8 = vector.broadcast %cst_4 : f32 to vector<2x8x1xf32>
    %9 = tpu.concatenate %7, %8 in 2 : vector<2x8x1xf32>, vector<2x8x1xf32> -> vector<2x8x2xf32>
    %10 = tpu.concatenate %8, %6 in 2 : vector<2x8x1xf32>, vector<2x8x1xf32> -> vector<2x8x2xf32>
    "tpu.trace_start"() <{level = 10 : i32, message = "bik,bjk->bij"}> : () -> ()
    %cst_5 = arith.constant dense<0.000000e+00> : vector<2x8x8xf32>
    %11 = tpu.matmul %9, %10, %cst_5 {dimension_numbers = #tpu.dot_dimension_numbers<[2], [2], [1], [1], [0, 0, 0, 1, 1, 1], [0], [0]>} : vector<2x8x2xf32>, vector<2x8x2xf32>, vector<2x8x8xf32> -> vector<2x8x8xf32>
    "tpu.trace_stop"() : () -> ()
    %cst_6 = arith.constant dense<0.000000e+00> : vector<2x8xf32>
    %12 = vector.multi_reduction <add>, %11, %cst_6 [2] : vector<2x8x8xf32> to vector<2x8xf32>
    %13 = vector.shape_cast %12 : vector<2x8xf32> to vector<2x8x1xf32>
    %cst_7 = arith.constant dense<0.000000e+00> : vector<2x1xf32>
    %14 = vector.multi_reduction <add>, %13, %cst_7 [1] : vector<2x8x1xf32> to vector<2x1xf32>
    %15 = vector.shape_cast %14 : vector<2x1xf32> to vector<2x1x1xf32>
    %16 = arith.mulf %11, %11 : vector<2x8x8xf32>
    %cst_8 = arith.constant dense<0.000000e+00> : vector<2x8xf32>
    %17 = vector.multi_reduction <add>, %16, %cst_8 [2] : vector<2x8x8xf32> to vector<2x8xf32>
    %18 = vector.shape_cast %17 : vector<2x8xf32> to vector<2x8x1xf32>
    %cst_9 = arith.constant dense<0.000000e+00> : vector<2x1xf32>
    %19 = vector.multi_reduction <add>, %18, %cst_9 [1] : vector<2x8x1xf32> to vector<2x1xf32>
    %20 = vector.shape_cast %19 : vector<2x1xf32> to vector<2x1x1xf32>
    %cst_10 = arith.constant 1.562500e-02 : f32
    %21 = vector.broadcast %cst_10 : f32 to vector<2x1x1xf32>
    %22 = arith.mulf %15, %21 : vector<2x1x1xf32>
    %cst_11 = arith.constant 1.562500e-02 : f32
    %23 = vector.broadcast %cst_11 : f32 to vector<2x1x1xf32>
    %24 = arith.mulf %20, %23 : vector<2x1x1xf32>
    %25 = arith.mulf %22, %22 : vector<2x1x1xf32>
    %26 = arith.subf %24, %25 : vector<2x1x1xf32>
    %cst_12 = arith.constant 9.99999982E-15 : f32
    %27 = vector.broadcast %cst_12 : f32 to vector<2x1x1xf32>
    %28 = arith.addf %26, %27 : vector<2x1x1xf32>
    %29 = math.rsqrt %28 : vector<2x1x1xf32>
    %30 = vector.broadcast %22 : vector<2x1x1xf32> to vector<2x8x8xf32>
    %31 = arith.subf %11, %30 : vector<2x8x8xf32>
    %32 = vector.broadcast %29 : vector<2x1x1xf32> to vector<2x8x8xf32>
    %33 = arith.mulf %31, %32 : vector<2x8x8xf32>
    %c0_13 = arith.constant 0 : index
    %c0_14 = arith.constant 0 : index
    %34 = vector.load %arg2[%c0_13, %c0_14] : memref<8x8xf32, #tpu.memory_space<vmem>>, vector<8x8xf32>
    %35 = vector.shape_cast %34 : vector<8x8xf32> to vector<1x8x8xf32>
    %36 = vector.broadcast %35 : vector<1x8x8xf32> to vector<2x8x8xf32>
    %37 = arith.mulf %33, %36 : vector<2x8x8xf32>
    %c0_15 = arith.constant 0 : index
    %c0_16 = arith.constant 0 : index
    %38 = vector.load %arg3[%c0_15, %c0_16] : memref<8x8xf32, #tpu.memory_space<vmem>>, vector<8x8xf32>
    %39 = vector.shape_cast %38 : vector<8x8xf32> to vector<1x8x8xf32>
    %40 = vector.broadcast %39 : vector<1x8x8xf32> to vector<2x8x8xf32>
    %41 = arith.addf %37, %40 : vector<2x8x8xf32>
    %cst_17 = arith.constant 2.000000e-01 : f32
    %42 = vector.broadcast %cst_17 : f32 to vector<2x8x8xf32>
    %43 = arith.mulf %42, %41 : vector<2x8x8xf32>
    %44 = arith.maximumf %41, %43 : vector<2x8x8xf32>
    %cst_18 = arith.constant dense<0xFF800000> : vector<2x8xf32>
    %45 = vector.multi_reduction <maximumf>, %44, %cst_18 [1] : vector<2x8x8xf32> to vector<2x8xf32>
    %46 = vector.shape_cast %45 : vector<2x8xf32> to vector<2x1x8xf32>
    %47 = vector.broadcast %46 : vector<2x1x8xf32> to vector<2x8x8xf32>
    %48 = arith.subf %44, %47 : vector<2x8x8xf32>
    %49 = math.exp %48 : vector<2x8x8xf32>
    %cst_19 = arith.constant dense<0.000000e+00> : vector<2x8xf32>
    %50 = vector.multi_reduction <add>, %49, %cst_19 [1] : vector<2x8x8xf32> to vector<2x8xf32>
    %51 = vector.shape_cast %50 : vector<2x8xf32> to vector<2x1x8xf32>
    %52 = tpu.reciprocal %51 {approx = true} : vector<2x1x8xf32> -> vector<2x1x8xf32>
    %53 = arith.mulf %51, %52 : vector<2x1x8xf32>
    %cst_20 = arith.constant 2.000000e+00 : f32
    %54 = vector.broadcast %cst_20 : f32 to vector<2x1x8xf32>
    %55 = arith.subf %54, %53 : vector<2x1x8xf32>
    %56 = arith.mulf %52, %55 : vector<2x1x8xf32>
    %57 = vector.broadcast %56 : vector<2x1x8xf32> to vector<2x8x8xf32>
    %58 = arith.mulf %49, %57 : vector<2x8x8xf32>
    "tpu.trace_start"() <{level = 10 : i32, message = "bij,bjf->bif"}> : () -> ()
    %cst_21 = arith.constant dense<0.000000e+00> : vector<2x8x16xf32>
    %59 = tpu.matmul %58, %2, %cst_21 {dimension_numbers = #tpu.dot_dimension_numbers<[2], [1], [1], [2], [0, 0, 0, 1, 1, 2], [0], [0]>} : vector<2x8x8xf32>, vector<2x8x16xf32>, vector<2x8x16xf32> -> vector<2x8x16xf32>
    "tpu.trace_stop"() : () -> ()
    %60 = arith.negf %59 : vector<2x8x16xf32>
    %61 = math.exp %60 : vector<2x8x16xf32>
    %cst_22 = arith.constant 1.000000e+00 : f32
    %62 = vector.broadcast %cst_22 : f32 to vector<2x8x16xf32>
    %63 = arith.addf %62, %61 : vector<2x8x16xf32>
    %64 = arith.divf %62, %63 : vector<2x8x16xf32>
    %65 = vector.extract_strided_slice %64 {offsets = [0, 0, 0], sizes = [2, 1, 16], strides = [1, 1, 1]} : vector<2x8x16xf32> to vector<2x1x16xf32>
    %66 = vector.shape_cast %65 : vector<2x1x16xf32> to vector<2x16xf32>
    %c0_23 = arith.constant 0 : index
    %c0_24 = arith.constant 0 : index
    %c0_25 = arith.constant 0 : index
    %67 = vector.load %arg5[%c0_23, %c0_24, %c0_25] : memref<1x2x128xf32, #tpu.memory_space<vmem>>, vector<1x2x16xf32>
    %68 = vector.shape_cast %67 : vector<1x2x16xf32> to vector<2x16xf32>
    %69 = vector.shape_cast %66 : vector<2x16xf32> to vector<1x2x16xf32>
    tpu.vector_store %arg5[%c0_23, %c0_24, %c0_25], %69 {strides = array<i32>} : memref<1x2x128xf32, #tpu.memory_space<vmem>>, vector<1x2x16xf32>,
    %70 = vector.extract_strided_slice %64 {offsets = [0, 1, 0], sizes = [2, 1, 16], strides = [1, 1, 1]} : vector<2x8x16xf32> to vector<2x1x16xf32>
    %71 = vector.shape_cast %70 : vector<2x1x16xf32> to vector<2x16xf32>
    %c0_26 = arith.constant 0 : index
    %c0_27 = arith.constant 0 : index
    %c16 = arith.constant 16 : index
    %72 = vector.load %arg5[%c0_26, %c0_27, %c16] : memref<1x2x128xf32, #tpu.memory_space<vmem>>, vector<1x2x16xf32>
    %73 = vector.shape_cast %72 : vector<1x2x16xf32> to vector<2x16xf32>
    %74 = vector.shape_cast %71 : vector<2x16xf32> to vector<1x2x16xf32>
    tpu.vector_store %arg5[%c0_26, %c0_27, %c16], %74 {strides = array<i32>} : memref<1x2x128xf32, #tpu.memory_space<vmem>>, vector<1x2x16xf32>,
    %75 = vector.extract_strided_slice %64 {offsets = [0, 2, 0], sizes = [2, 1, 16], strides = [1, 1, 1]} : vector<2x8x16xf32> to vector<2x1x16xf32>
    %76 = vector.shape_cast %75 : vector<2x1x16xf32> to vector<2x16xf32>
    %c0_28 = arith.constant 0 : index
    %c0_29 = arith.constant 0 : index
    %c32 = arith.constant 32 : index
    %77 = vector.load %arg5[%c0_28, %c0_29, %c32] : memref<1x2x128xf32, #tpu.memory_space<vmem>>, vector<1x2x16xf32>
    %78 = vector.shape_cast %77 : vector<1x2x16xf32> to vector<2x16xf32>
    %79 = vector.shape_cast %76 : vector<2x16xf32> to vector<1x2x16xf32>
    tpu.vector_store %arg5[%c0_28, %c0_29, %c32], %79 {strides = array<i32>} : memref<1x2x128xf32, #tpu.memory_space<vmem>>, vector<1x2x16xf32>,
    %80 = vector.extract_strided_slice %64 {offsets = [0, 3, 0], sizes = [2, 1, 16], strides = [1, 1, 1]} : vector<2x8x16xf32> to vector<2x1x16xf32>
    %81 = vector.shape_cast %80 : vector<2x1x16xf32> to vector<2x16xf32>
    %c0_30 = arith.constant 0 : index
    %c0_31 = arith.constant 0 : index
    %c48 = arith.constant 48 : index
    %82 = vector.load %arg5[%c0_30, %c0_31, %c48] : memref<1x2x128xf32, #tpu.memory_space<vmem>>, vector<1x2x16xf32>
    %83 = vector.shape_cast %82 : vector<1x2x16xf32> to vector<2x16xf32>
    %84 = vector.shape_cast %81 : vector<2x16xf32> to vector<1x2x16xf32>
    tpu.vector_store %arg5[%c0_30, %c0_31, %c48], %84 {strides = array<i32>} : memref<1x2x128xf32, #tpu.memory_space<vmem>>, vector<1x2x16xf32>,
    %85 = vector.extract_strided_slice %64 {offsets = [0, 4, 0], sizes = [2, 1, 16], strides = [1, 1, 1]} : vector<2x8x16xf32> to vector<2x1x16xf32>
    %86 = vector.shape_cast %85 : vector<2x1x16xf32> to vector<2x16xf32>
    %c0_32 = arith.constant 0 : index
    %c0_33 = arith.constant 0 : index
    %c64 = arith.constant 64 : index
    %87 = vector.load %arg5[%c0_32, %c0_33, %c64] : memref<1x2x128xf32, #tpu.memory_space<vmem>>, vector<1x2x16xf32>
    %88 = vector.shape_cast %87 : vector<1x2x16xf32> to vector<2x16xf32>
    %89 = vector.shape_cast %86 : vector<2x16xf32> to vector<1x2x16xf32>
    tpu.vector_store %arg5[%c0_32, %c0_33, %c64], %89 {strides = array<i32>} : memref<1x2x128xf32, #tpu.memory_space<vmem>>, vector<1x2x16xf32>,
    %90 = vector.extract_strided_slice %64 {offsets = [0, 5, 0], sizes = [2, 1, 16], strides = [1, 1, 1]} : vector<2x8x16xf32> to vector<2x1x16xf32>
    %91 = vector.shape_cast %90 : vector<2x1x16xf32> to vector<2x16xf32>
    %c0_34 = arith.constant 0 : index
    %c0_35 = arith.constant 0 : index
    %c80 = arith.constant 80 : index
    %92 = vector.load %arg5[%c0_34, %c0_35, %c80] : memref<1x2x128xf32, #tpu.memory_space<vmem>>, vector<1x2x16xf32>
    %93 = vector.shape_cast %92 : vector<1x2x16xf32> to vector<2x16xf32>
    %94 = vector.shape_cast %91 : vector<2x16xf32> to vector<1x2x16xf32>
    tpu.vector_store %arg5[%c0_34, %c0_35, %c80], %94 {strides = array<i32>} : memref<1x2x128xf32, #tpu.memory_space<vmem>>, vector<1x2x16xf32>,
    %95 = vector.extract_strided_slice %64 {offsets = [0, 6, 0], sizes = [2, 1, 16], strides = [1, 1, 1]} : vector<2x8x16xf32> to vector<2x1x16xf32>
    %96 = vector.shape_cast %95 : vector<2x1x16xf32> to vector<2x16xf32>
    %c0_36 = arith.constant 0 : index
    %c0_37 = arith.constant 0 : index
    %c96 = arith.constant 96 : index
    %97 = vector.load %arg5[%c0_36, %c0_37, %c96] : memref<1x2x128xf32, #tpu.memory_space<vmem>>, vector<1x2x16xf32>
    %98 = vector.shape_cast %97 : vector<1x2x16xf32> to vector<2x16xf32>
    %99 = vector.shape_cast %96 : vector<2x16xf32> to vector<1x2x16xf32>
    tpu.vector_store %arg5[%c0_36, %c0_37, %c96], %99 {strides = array<i32>} : memref<1x2x128xf32, #tpu.memory_space<vmem>>, vector<1x2x16xf32>,
    %100 = vector.extract_strided_slice %64 {offsets = [0, 7, 0], sizes = [2, 1, 16], strides = [1, 1, 1]} : vector<2x8x16xf32> to vector<2x1x16xf32>
    %101 = vector.shape_cast %100 : vector<2x1x16xf32> to vector<2x16xf32>
    %c0_38 = arith.constant 0 : index
    %c0_39 = arith.constant 0 : index
    %c112 = arith.constant 112 : index
    %102 = vector.load %arg5[%c0_38, %c0_39, %c112] : memref<1x2x128xf32, #tpu.memory_space<vmem>>, vector<1x2x16xf32>
    %103 = vector.shape_cast %102 : vector<1x2x16xf32> to vector<2x16xf32>
    %104 = vector.shape_cast %101 : vector<2x16xf32> to vector<1x2x16xf32>
    tpu.vector_store %arg5[%c0_38, %c0_39, %c112], %104 {strides = array<i32>} : memref<1x2x128xf32, #tpu.memory_space<vmem>>, vector<1x2x16xf32>,
    return
  }
  func.func @transform_0(%arg0: i32) -> (i32, i32) {
    %c0_i32 = arith.constant 0 : i32
    %c0_i32_0 = arith.constant 0 : i32
    %c0_i32_1 = arith.constant 0 : i32
    return %c0_i32, %c0_i32_0 : i32, i32
  }
  func.func @transform_1(%arg0: i32) -> (i32, i32) {
    %c0_i32 = arith.constant 0 : i32
    %c0_i32_0 = arith.constant 0 : i32
    %c0_i32_1 = arith.constant 0 : i32
    return %c0_i32, %c0_i32_0 : i32, i32
  }
  func.func @transform_2(%arg0: i32) -> (i32, i32) {
    %c0_i32 = arith.constant 0 : i32
    %c0_i32_0 = arith.constant 0 : i32
    %c0_i32_1 = arith.constant 0 : i32
    return %c0_i32, %c0_i32_0 : i32, i32
  }
  func.func @transform_3(%arg0: i32) -> (i32, i32, i32) {
    %c0_i32 = arith.constant 0 : i32
    %c0_i32_0 = arith.constant 0 : i32
    %c0_i32_1 = arith.constant 0 : i32
    return %arg0, %c0_i32, %c0_i32_0 : i32, i32, i32
  }
  func.func @transform_4(%arg0: i32) -> (i32, i32, i32) {
    %c0_i32 = arith.constant 0 : i32
    %c0_i32_0 = arith.constant 0 : i32
    %c0_i32_1 = arith.constant 0 : i32
    return %arg0, %c0_i32, %c0_i32_0 : i32, i32, i32
  }
}

</mosaic_0001>

<llo_original>
// kernel: tpu_custom_call.1
$region0: #{tpu_custom_call.1}
  #allocation0 [shape = 'u32[]', space=smem, size = 0x4, offset = 0x4, fixed_abs, tag = 'smem constant byte address 0x4 - core index']
  #allocation1 [shape = 'u32[72,128]{1,0:T(1,128)}', space=vmem, size = 0x9000, scoped, tag = 'internal scratch']
  %s0 = inlined_call_operand.vmem [shape: f32[16,2], index: 0, kind: input, shape index: {}]
  %s1 = inlined_call_operand.hbm [shape: f32[8,8], index: 1, kind: input, shape index: {}]
  %s2 = inlined_call_operand.hbm [shape: f32[8,8], index: 2, kind: input, shape index: {}]
  %s3 = inlined_call_operand.vmem [shape: f32[1,16,16], index: 3, kind: input, shape index: {}]
  %s4 = inlined_call_operand.hbm [shape: f32[1,2,128], index: 4, kind: output, shape index: {}]
  %s5 = sld [smem:[#allocation0]]
  $region34: #{tpu_custom_call.1} parent=0
    _
  %s7 = ssub.s32 1, %s5
  %s8 = scalar_select 0, %s7, %s5
  $region1: #{tpu_custom_call.1} parent=0
    #allocation2 [shape = 'u8[4096]{0}', space=vmem, size = 0x1000, scoped, tag = 'input window, operand 1, single buffered']
    #allocation3 [shape = 's32[1]{0}', space=sflag, size = 0x4, scoped, tag = 'scoped memory for tpu_custom_call.1']
    #allocation4 [shape = 's32[1]{0}', space=sflag, size = 0x4, scoped, tag = 'scoped memory for tpu_custom_call.1']
    #allocation5 [shape = 'u8[4096]{0}', space=vmem, size = 0x1000, scoped, tag = 'input window, operand 2, single buffered']
    #allocation6 [shape = 's32[1]{0}', space=sflag, size = 0x4, scoped, tag = 'scoped memory for tpu_custom_call.1']
    #allocation7 [shape = 'u8[1024]{0}', space=vmem, size = 0x400, scoped, tag = 'output window, operand 0, single buffered']
    %9 = vsyncpa [#allocation3], 0
    %10 = vsyncpa [#allocation6], 0
    %11 = vsyncpa [#allocation4], 0
    // Predicated region
    $region2: #{tpu_custom_call.1} parent=1 // pred_check
      _
    $region3: #{tpu_custom_call.1} parent=1 // pred_check_branch
      %13 = sbr.rel (0) target = $region5
    $region4: #{tpu_custom_call.1} parent=1 // pred_region
      _
    $region5: #{tpu_custom_call.1} parent=1 // pred_fallthru
      _
    // Predicated region
    $region6: #{tpu_custom_call.1} parent=1 // pred_check
      _
    $region7: #{tpu_custom_call.1} parent=1 // pred_check_branch
      %15 = sbr.rel (0) target = $region9
    $region8: #{tpu_custom_call.1} parent=1 // pred_region
      %17 = vsyncadd [#allocation3], 0
      %s19 = sshll.u32 %s1, 4
      %s20 = int_to_ptr.hbm [resolvable:$true] %s19
      %s21 = sshll.u32 [#allocation2], 4
      %s22 = int_to_ptr.vmem [resolvable:$true] %s21
      %24 = dma.hbm_to_vmem [thread:$0]  %s20, 128, %s22, [#allocation3]
    $region9: #{tpu_custom_call.1} parent=1 // pred_fallthru
      _
    // Predicated region
    $region10: #{tpu_custom_call.1} parent=1 // pred_check
      _
    $region11: #{tpu_custom_call.1} parent=1 // pred_check_branch
      %26 = sbr.rel (0) target = $region13
    $region12: #{tpu_custom_call.1} parent=1 // pred_region
      %28 = vsyncadd [#allocation6], 0
      %s30 = sshll.u32 %s2, 4
      %s31 = int_to_ptr.hbm [resolvable:$true] %s30
      %s32 = sshll.u32 [#allocation5], 4
      %s33 = int_to_ptr.vmem [resolvable:$true] %s32
      %35 = dma.hbm_to_vmem [thread:$0]  %s31, 128, %s33, [#allocation6]
    $region13: #{tpu_custom_call.1} parent=1 // pred_fallthru
      _
    // Predicated region
    $region14: #{tpu_custom_call.1} parent=1 // pred_check
      _
    $region15: #{tpu_custom_call.1} parent=1 // pred_check_branch
      %37 = sbr.rel (0) target = $region17
    $region16: #{tpu_custom_call.1} parent=1 // pred_region
      _
    $region17: #{tpu_custom_call.1} parent=1 // pred_fallthru
      _
    // Predicated region
    $region18: #{tpu_custom_call.1} parent=1 // pred_check
      _
    $region19: #{tpu_custom_call.1} parent=1 // pred_check_branch
      %39 = sbr.rel (0) target = $region21
    $region20: #{tpu_custom_call.1} parent=1 // pred_region
      %41 = dma.done [#allocation3], 128
    $region21: #{tpu_custom_call.1} parent=1 // pred_fallthru
      _
    // Predicated region
    $region22: #{tpu_custom_call.1} parent=1 // pred_check
      _
    $region23: #{tpu_custom_call.1} parent=1 // pred_check_branch
      %43 = sbr.rel (0) target = $region25
    $region24: #{tpu_custom_call.1} parent=1 // pred_region
      %45 = dma.done [#allocation6], 128
    $region25: #{tpu_custom_call.1} parent=1 // pred_fallthru
      _
    %v46 = vld [vmem:[%s3] sm:$0xff]
    %v47 = vld [vmem:[%s3 + $0x8] sm:$0xff]
    %v48 = vld [vmem:[%s0] sm:$0xff]
    %v49 = vld [vmem:[%s0 + $0x8] sm:$0xff]
    %vm50 = vcmask 130048
    %v52 = vsel %vm50, %v46, 0
    %v55 = vsel %vm50, %v47, 0
    %57 = vmatpush.msra.mxu0 0.0
    %58 = vmatpush.msra.mxu0 0.0
    %59 = vmatpush.msra.mxu0 0.0
    %60 = vmatpush.msra.mxu0 0.0
    %61 = vmatpush.msra.mxu0 0.0
    %62 = vmatpush.msra.mxu0 0.0
    %63 = vmatpush.msra.mxu0 0.0
    %64 = vmatpush.msra.mxu0 0.0
    %65 = vmatpush.msra.mxu0 0.0
    %66 = vmatpush.msra.mxu0 0.0
    %67 = vmatpush.msra.mxu0 0.0
    %68 = vmatpush.msra.mxu0 0.0
    %69 = vmatpush.msra.mxu0 0.0
    %70 = vmatpush.msra.mxu0 0.0
    %71 = vmatpush.msra.mxu0 %v49
    %72 = vmatpush.msra.mxu0 %v48
    %73 = vmatmul.f32.gmra.mxu0 %v52
    %v74 = vpop.f32.mrf.mxu0
    %v75 = vadd.f32 0.0, %v74
    %76 = vmatmul.f32.gmra.mxu0 %v55
    %v77 = vpop.f32.mrf.mxu0
    %v78 = vadd.f32 0.0, %v77
    %79 = vdwg.mxu0
    %82 = vrot.lane.b32.xlu0 %v75, 127
    %v83 = vpop.permute.xlu0 %82
    %84 = vrot.lane.b32.xlu0 %v78, 127
    %v85 = vpop.permute.xlu0 %84
    %vm88 = vcmask 7168
    %v89 = vsel %vm88, %v83, 1.0
    %v90 = vsel %vm88, %v85, 1.0
    %91 = vrot.lane.b32.xlu0 %v75, 1
    %v92 = vpop.permute.xlu0 %91
    %93 = vrot.lane.b32.xlu0 %v78, 1
    %v94 = vpop.permute.xlu0 %93
    %v97 = vsel %vm88, 1.0, %v92
    %v98 = vsel %vm88, 1.0, %v94
    %vm99 = vcmask 15360
    %v101 = vsel %vm99, %v89, 0
    %v104 = vsel %vm99, %v97, 0
    %106 = vmatpush.xpose.msra.mxu0 0.0
    %107 = vmatpush.xpose.msra.mxu0 0.0
    %108 = vmatpush.xpose.msra.mxu0 0.0
    %109 = vmatpush.xpose.msra.mxu0 0.0
    %110 = vmatpush.xpose.msra.mxu0 0.0
    %111 = vmatpush.xpose.msra.mxu0 0.0
    %112 = vmatpush.xpose.msra.mxu0 0.0
    %113 = vmatpush.xpose.msra.mxu0 0.0
    %114 = vmatpush.xpose.msra.mxu0 0.0
    %115 = vmatpush.xpose.msra.mxu0 0.0
    %116 = vmatpush.xpose.msra.mxu0 0.0
    %117 = vmatpush.xpose.msra.mxu0 0.0
    %118 = vmatpush.xpose.msra.mxu0 0.0
    %119 = vmatpush.xpose.msra.mxu0 0.0
    %120 = vmatpush.xpose.msra.mxu0 0.0
    %121 = vmatpush.xpose.msra.mxu0 %v104
    %122 = vmatmul.f32.gmra.mxu0 %v101
    %v123 = vpop.f32.mrf.mxu0
    %v124 = vadd.f32 0.0, %v123
    %125 = vdwg.mxu0
    %v127 = vsel %vm99, %v90, 0
    %v130 = vsel %vm99, %v98, 0
    %132 = vmatpush.xpose.msra.mxu0 0.0
    %133 = vmatpush.xpose.msra.mxu0 0.0
    %134 = vmatpush.xpose.msra.mxu0 0.0
    %135 = vmatpush.xpose.msra.mxu0 0.0
    %136 = vmatpush.xpose.msra.mxu0 0.0
    %137 = vmatpush.xpose.msra.mxu0 0.0
    %138 = vmatpush.xpose.msra.mxu0 0.0
    %139 = vmatpush.xpose.msra.mxu0 0.0
    %140 = vmatpush.xpose.msra.mxu0 0.0
    %141 = vmatpush.xpose.msra.mxu0 0.0
    %142 = vmatpush.xpose.msra.mxu0 0.0
    %143 = vmatpush.xpose.msra.mxu0 0.0
    %144 = vmatpush.xpose.msra.mxu0 0.0
    %145 = vmatpush.xpose.msra.mxu0 0.0
    %146 = vmatpush.xpose.msra.mxu0 0.0
    %147 = vmatpush.xpose.msra.mxu0 %v130
    %148 = vmatmul.f32.gmra.mxu0 %v127
    %v149 = vpop.f32.mrf.mxu0
    %v150 = vadd.f32 0.0, %v149
    %151 = vdwg.mxu0
    %vm152 = vcmask 64512
    %v153 = vsel %vm152, %v124, 0.0
    %154 = vadd.xlane.f32.xlu0 %v153
    %v155 = vpop.xlane.xlu0 %154
    %v156 = vsel %vm152, %v150, 0.0
    %157 = vadd.xlane.f32.xlu0 %v156
    %v158 = vpop.xlane.xlu0 %157
    %v159 = vrot.slane %v155, 4
    %v160 = vadd.f32 %v155, %v159
    %v161 = vrot.slane %v160, 2
    %v162 = vadd.f32 %v160, %v161
    %v163 = vrot.slane %v162, 1
    %v164 = vadd.f32 %v162, %v163
    %v165 = vrot.slane %v158, 4
    %v166 = vadd.f32 %v158, %v165
    %v167 = vrot.slane %v166, 2
    %v168 = vadd.f32 %v166, %v167
    %v169 = vrot.slane %v168, 1
    %v170 = vadd.f32 %v168, %v169
    %v171 = vmul.f32 %v124, %v124
    %v172 = vmul.f32 %v150, %v150
    %v173 = vsel %vm152, %v171, 0.0
    %174 = vadd.xlane.f32.xlu0 %v173
    %v175 = vpop.xlane.xlu0 %174
    %v176 = vsel %vm152, %v172, 0.0
    %177 = vadd.xlane.f32.xlu0 %v176
    %v178 = vpop.xlane.xlu0 %177
    %v179 = vrot.slane %v175, 4
    %v180 = vadd.f32 %v175, %v179
    %v181 = vrot.slane %v180, 2
    %v182 = vadd.f32 %v180, %v181
    %v183 = vrot.slane %v182, 1
    %v184 = vadd.f32 %v182, %v183
    %v185 = vrot.slane %v178, 4
    %v186 = vadd.f32 %v178, %v185
    %v187 = vrot.slane %v186, 2
    %v188 = vadd.f32 %v186, %v187
    %v189 = vrot.slane %v188, 1
    %v190 = vadd.f32 %v188, %v189
    %v191 = vmul.f32 %v164, 0.015625
    %v192 = vmul.f32 %v170, 0.015625
    %v193 = vmul.f32 %v184, 0.015625
    %v194 = vmul.f32 %v190, 0.015625
    %v195 = vmul.f32 %v191, %v191
    %v196 = vmul.f32 %v192, %v192
    %v197 = vsub.f32 %v193, %v195
    %v198 = vsub.f32 %v194, %v196
    %v199 = vadd.f32 %v197, 1e-14
    %v200 = vadd.f32 %v198, 1e-14
    %v201 = vrsqrt.pop %v199
    %v202 = vmul.f32 %v201, %v199
    %v203 = vmul.f32 %v202, %v201
    %v204 = vmul.f32 0.5, %v203
    %v205 = vsub.f32 1.5, %v204
    %v206 = vmul.f32 %v201, %v205
    %vm207 = vweird.f32 %v199
    %vm208 = vweird.f32 %v201
    %vm209 = vmor %vm207, %vm208
    %v210 = vsel %vm209, %v201, %v206
    %v211 = vrsqrt.pop %v200
    %v212 = vmul.f32 %v211, %v200
    %v213 = vmul.f32 %v212, %v211
    %v214 = vmul.f32 0.5, %v213
    %v215 = vsub.f32 1.5, %v214
    %v216 = vmul.f32 %v211, %v215
    %vm217 = vweird.f32 %v200
    %vm218 = vweird.f32 %v211
    %vm219 = vmor %vm217, %vm218
    %v220 = vsel %vm219, %v211, %v216
    %v221 = vsub.f32 %v124, %v191
    %v222 = vsub.f32 %v150, %v192
    %v223 = vmul.f32 %v221, %v210
    %v224 = vmul.f32 %v222, %v220
    %v225 = vld [vmem:[#allocation2] sm:$0xff]
    %v226 = vmul.f32 %v223, %v225
    %v227 = vmul.f32 %v224, %v225
    %v228 = vld [vmem:[#allocation5] sm:$0xff]
    %v229 = vadd.f32 %v226, %v228
    %v230 = vadd.f32 %v227, %v228
    %v231 = vmul.f32 %v229, 0.2
    %v232 = vmul.f32 %v230, 0.2
    %v233 = vmax.f32 %v229, %v231
    %v234 = vmax.f32 %v230, %v232
    %v235 = vsel %vm152, %v233, -inf
    %v236 = vrot.slane %v235, 4
    %v237 = vmax.f32 %v235, %v236
    %v238 = vrot.slane %v237, 2
    %v239 = vmax.f32 %v237, %v238
    %v240 = vrot.slane %v239, 1
    %v241 = vmax.f32 %v239, %v240
    %v242 = vsel %vm152, %v234, -inf
    %v243 = vrot.slane %v242, 4
    %v244 = vmax.f32 %v242, %v243
    %v245 = vrot.slane %v244, 2
    %v246 = vmax.f32 %v244, %v245
    %v247 = vrot.slane %v246, 1
    %v248 = vmax.f32 %v246, %v247
    %v249 = vsub.f32 %v233, %v241
    %v250 = vsub.f32 %v234, %v248
    %v251 = vmul.f32 %v249, 1.442695
    %v252 = vpow.pop %v251
    %v253 = vmul.f32 %v250, 1.442695
    %v254 = vpow.pop %v253
    %v255 = vsel %vm152, %v252, 0.0
    %v256 = vrot.slane %v255, 4
    %v257 = vadd.f32 %v255, %v256
    %v258 = vrot.slane %v257, 2
    %v259 = vadd.f32 %v257, %v258
    %v260 = vrot.slane %v259, 1
    %v261 = vadd.f32 %v259, %v260
    %v262 = vsel %vm152, %v254, 0.0
    %v263 = vrot.slane %v262, 4
    %v264 = vadd.f32 %v262, %v263
    %v265 = vrot.slane %v264, 2
    %v266 = vadd.f32 %v264, %v265
    %v267 = vrot.slane %v266, 1
    %v268 = vadd.f32 %v266, %v267
    %v269 = vrcp.pop %v261
    %v270 = vrcp.pop %v268
    %v271 = vmul.f32 %v261, %v269
    %v272 = vmul.f32 %v268, %v270
    %v273 = vsub.f32 2.0, %v271
    %v274 = vsub.f32 2.0, %v272
    %v275 = vmul.f32 %v269, %v273
    %v276 = vmul.f32 %v270, %v274
    %v277 = vmul.f32 %v252, %v275
    %v278 = vmul.f32 %v254, %v276
    %v280 = vsel %vm152, %v277, 0
    %282 = vmatpush.msra.mxu0 0.0
    %283 = vmatpush.msra.mxu0 0.0
    %284 = vmatpush.msra.mxu0 0.0
    %285 = vmatpush.msra.mxu0 0.0
    %286 = vmatpush.msra.mxu0 0.0
    %287 = vmatpush.msra.mxu0 0.0
    %288 = vmatpush.msra.mxu0 0.0
    %289 = vmatpush.msra.mxu0 0.0
    %290 = vmatpush.msra.mxu0 0.0
    %291 = vmatpush.msra.mxu0 0.0
    %292 = vmatpush.msra.mxu0 0.0
    %293 = vmatpush.msra.mxu0 0.0
    %294 = vmatpush.msra.mxu0 0.0
    %295 = vmatpush.msra.mxu0 0.0
    %296 = vmatpush.msra.mxu0 0.0
    %297 = vmatpush.msra.mxu0 %v46
    %298 = vmatmul.f32.gmra.mxu0 %v280
    %v299 = vpop.f32.mrf.mxu0
    %v300 = vadd.f32 0.0, %v299
    %301 = vdwg.mxu0
    %v303 = vsel %vm152, %v278, 0
    %305 = vmatpush.msra.mxu0 0.0
    %306 = vmatpush.msra.mxu0 0.0
    %307 = vmatpush.msra.mxu0 0.0
    %308 = vmatpush.msra.mxu0 0.0
    %309 = vmatpush.msra.mxu0 0.0
    %310 = vmatpush.msra.mxu0 0.0
    %311 = vmatpush.msra.mxu0 0.0
    %312 = vmatpush.msra.mxu0 0.0
    %313 = vmatpush.msra.mxu0 0.0
    %314 = vmatpush.msra.mxu0 0.0
    %315 = vmatpush.msra.mxu0 0.0
    %316 = vmatpush.msra.mxu0 0.0
    %317 = vmatpush.msra.mxu0 0.0
    %318 = vmatpush.msra.mxu0 0.0
    %319 = vmatpush.msra.mxu0 0.0
    %320 = vmatpush.msra.mxu0 %v47
    %321 = vmatmul.f32.gmra.mxu0 %v303
    %v322 = vpop.f32.mrf.mxu0
    %v323 = vadd.f32 0.0, %v322
    %324 = vdwg.mxu0
    %v325 = vxor.u32 %v300, 2147483648
    %v326 = vxor.u32 %v323, 2147483648
    %v327 = vmul.f32 %v325, 1.442695
    %v328 = vpow.pop %v327
    %v329 = vmul.f32 %v326, 1.442695
    %v330 = vpow.pop %v329
    %v331 = vadd.f32 %v328, 1.0
    %v332 = vadd.f32 %v330, 1.0
    %v333 = vrcp.pop %v331
    %v334 = vmul.f32 %v331, %v333
    %v335 = vsub.f32 1.0, %v334
    %v336 = vmul.f32 %v333, %v335
    %v337 = vadd.f32 %v333, %v336
    %vm338 = vweird.f32 %v331
    %vm339 = vweird.f32 %v333
    %vm340 = vmor %vm338, %vm339
    %v341 = vsel %vm340, %v333, %v337
    %v342 = vand.u32 2147483647, %v331
    %vm343 = vcmp.eq.f32.partialorder %v342, 8.507059e+37
    %v344 = vand.u32 %v331, 2147483648
    %v345 = vor.u32 1.1754944e-38, %v344
    %v346 = vsel %vm343, %v345, %v341
    %v347 = vmul.f32 1.0, %v346
    %v348 = vrcp.pop %v332
    %v349 = vmul.f32 %v332, %v348
    %v350 = vsub.f32 1.0, %v349
    %v351 = vmul.f32 %v348, %v350
    %v352 = vadd.f32 %v348, %v351
    %vm353 = vweird.f32 %v332
    %vm354 = vweird.f32 %v348
    %vm355 = vmor %vm353, %vm354
    %v356 = vsel %vm355, %v348, %v352
    %v357 = vand.u32 2147483647, %v332
    %vm358 = vcmp.eq.f32.partialorder %v357, 8.507059e+37
    %v359 = vand.u32 %v332, 2147483648
    %v360 = vor.u32 1.1754944e-38, %v359
    %v361 = vsel %vm358, %v360, %v356
    %v362 = vmul.f32 1.0, %v361
    %v365 = vrot.slane %v362, 7
    %vm366 = vcmask 1041409
    %v367 = vsel %vm366, %v365, %v347
    %vm369 = vcmask 123904
    %370 = vst.msk [vmem:[#allocation7] sm:$0x3] %vm369, %v367
    %vm371 = vcmask 1042434
    %v372 = vsel %vm371, %v365, %v347
    %373 = vrot.lane.b32.xlu0 %v372, 16
    %v374 = vpop.permute.xlu0 %373
    %vm376 = vcmask 256129
    %377 = vst.msk [vmem:[#allocation7 - $0x1] sm:$0x6] %vm376, %v374
    %vm378 = vcmask 1043459
    %v379 = vsel %vm378, %v365, %v347
    %380 = vrot.lane.b32.xlu0 %v379, 32
    %v381 = vpop.permute.xlu0 %380
    %vm383 = vcmask 388354
    %384 = vst.msk [vmem:[#allocation7 - $0x2] sm:$0xc] %vm383, %v381
    %vm385 = vcmask 1044484
    %v386 = vsel %vm385, %v365, %v347
    %387 = vrot.lane.b32.xlu0 %v386, 48
    %v388 = vpop.permute.xlu0 %387
    %vm390 = vcmask 520579
    %391 = vst.msk [vmem:[#allocation7 - $0x3] sm:$0x18] %vm390, %v388
    %vm392 = vcmask 1045509
    %v393 = vsel %vm392, %v365, %v347
    %394 = vrot.lane.b32.xlu0 %v393, 64
    %v395 = vpop.permute.xlu0 %394
    %vm397 = vcmask 652804
    %398 = vst.msk [vmem:[#allocation7 - $0x4] sm:$0x30] %vm397, %v395
    %vm399 = vcmask 1046534
    %v400 = vsel %vm399, %v365, %v347
    %401 = vrot.lane.b32.xlu0 %v400, 80
    %v402 = vpop.permute.xlu0 %401
    %vm404 = vcmask 785029
    %405 = vst.msk [vmem:[#allocation7 - $0x5] sm:$0x60] %vm404, %v402
    %vm406 = vcmask 1047559
    %v407 = vsel %vm406, %v365, %v347
    %408 = vrot.lane.b32.xlu0 %v407, 96
    %v409 = vpop.permute.xlu0 %408
    %vm411 = vcmask 917254
    %412 = vst.msk [vmem:[#allocation7 - $0x6] sm:$0xc0] %vm411, %v409
    %413 = vrot.lane.b32.xlu0 %v347, 112
    %v414 = vpop.permute.xlu0 %413
    %415 = vrot.lane.b32.xlu0 %v365, 112
    %v416 = vpop.permute.xlu0 %415
    %vm419 = vcmask 1048455
    %420 = vst.msk [vmem:[#allocation7 - $0x7] sm:$0x80] %vm419, %v414
    %vm421 = vcmask 1041280
    %422 = vst.msk [vmem:[#allocation7 + $0x1] sm:$0x1] %vm421, %v416
    // Predicated region
    $region26: #{tpu_custom_call.1} parent=1 // pred_check
      _
    $region27: #{tpu_custom_call.1} parent=1 // pred_check_branch
      %424 = sbr.rel (0) target = $region29
    $region28: #{tpu_custom_call.1} parent=1 // pred_region
      %426 = vsyncadd [#allocation4], 0
      %s428 = sshll.u32 [#allocation7], 4
      %s429 = int_to_ptr.vmem [resolvable:$true] %s428
      %s430 = sshll.u32 %s4, 4
      %s431 = int_to_ptr.hbm [resolvable:$true] %s430
      %433 = dma.vmem_to_hbm [thread:$0]  %s429, 32, %s431, [#allocation4]
    $region29: #{tpu_custom_call.1} parent=1 // pred_fallthru
      _
    // Predicated region
    $region30: #{tpu_custom_call.1} parent=1 // pred_check
      _
    $region31: #{tpu_custom_call.1} parent=1 // pred_check_branch
      %435 = sbr.rel (0) target = $region33
    $region32: #{tpu_custom_call.1} parent=1 // pred_region
      %437 = dma.done [#allocation4], 32
    $region33: #{tpu_custom_call.1} parent=1 // pred_fallthru
      _
    %438 = vsyncpa [#allocation3], 1
    %439 = vsyncpa [#allocation6], 1
    %440 = vsyncpa [#allocation4], 1

</llo_original>
